<compile_context>
chip_gen: v7x
topology: tpu7x:2x2x1
jax: 0.10.0
libtpu: 0.0.40
codegen_flags: <defaults>
</compile_context>

<pallas_src>
import functools

import jax
import jax.numpy as jnp
from jax.experimental import pallas as pl
from jax.experimental.pallas import tpu as pltpu


def ta_kernel(x_ref,       # VMEM (1, R, C)   R = bv_tile * L stacked rows
              wqkv_ref,    # VMEM (C, 3*Ca)   fused Q|K|V weights
              bqkv_ref,    # VMEM (1, 3*Ca)   fused Q|K|V biases
              wfcg_ref,    # VMEM (Ca, C)     fc.weight^T * gamma
              bfcg_ref,    # VMEM (1, C)      fc.bias   * gamma
              mask_ref,    # VMEM (R, R)      additive block-diag causal mask
              o_ref,       # VMEM (1, R, C)
              *, Ca):
    x2 = x_ref[0]                                                  # (R, C)

    # Fused Q/K/V projection: one MXU push instead of three.
    qkv = jnp.dot(x2, wqkv_ref[...],
                  preferred_element_type=jnp.float32) + bqkv_ref[...]
    q = qkv[:, 0 * Ca:1 * Ca]                                      # (R, Ca)
    k = qkv[:, 1 * Ca:2 * Ca]
    v = qkv[:, 2 * Ca:3 * Ca]

    # Block-diagonal attention over the stacked rows: scores = Q K^T, then
    # subtract the precomputed additive mask (1e10 on causal-forbidden and
    # cross-slab entries, 0 elsewhere) -> exact torch semantics per slab.
    scores = jnp.einsum("ld,md->lm", q, k,
                        preferred_element_type=jnp.float32) - mask_ref[...]

    # Numerically-stable softmax over the key axis (dim=3 in the torch code).
    m = jnp.max(scores, axis=-1, keepdims=True)
    e = jnp.exp(scores - m)
    alpha = e * pl.reciprocal(jnp.sum(e, axis=-1, keepdims=True), approx=False)

    # Weighted values + (gamma-scaled) output projection + residual.
    va = jnp.dot(alpha, v, preferred_element_type=jnp.float32)     # (R, Ca)
    fc = jnp.dot(va, wfcg_ref[...],
                 preferred_element_type=jnp.float32) + bfcg_ref[...]

    o_ref[0] = x2 + fc


def ta_forward(x, params, bv_tile=4):
    """x: (B, V, L, C) float32. Returns (B, V, L, C)."""
    B, Vn, L, C = x.shape
    Ca = params["Q_weights"].shape[1]
    BV = B * Vn
    assert BV % bv_tile == 0, "B*V must be divisible by bv_tile"
    nsteps = BV // bv_tile
    R = bv_tile * L

    # Row-slab layout: (nsteps, bv_tile*L, C); kernel sees a 2-D (R, C) slab.
    x_flat = x.reshape(nsteps, R, C)

    # Fused QKV parameters; fc weight pre-transposed (torch Linear does x@W.T)
    # and gamma folded into the fc weight/bias (mathematically identical).
    wqkv = jnp.concatenate(
        [params["Q_weights"], params["K_weights"], params["V_weights"]],
        axis=1)                                                    # (C, 3Ca)
    bqkv = jnp.concatenate(
        [params["Q_bais"], params["K_bais"], params["V_bais"]]).reshape(1, 3 * Ca)
    gamma = params["gama"][0]
    wfcg = params["fc_weight"].T * gamma                           # (Ca, C)
    bfcg = (params["fc_bias"] * gamma).reshape(1, C)

    # Additive mask: 0 where query row may attend the key column (same slab
    # AND causal), 1e10 otherwise (matches torch's triu(ones)*1e10 per slab;
    # cross-slab 1e10 makes those softmax terms exactly 0).
    idx = jnp.arange(R)
    slab = idx // L
    allowed = (slab[:, None] == slab[None, :]) & (idx[None, :] <= idx[:, None])
    addmask = jnp.where(allowed, 0.0, 1e10).astype(jnp.float32)    # (R, R)

    kernel = functools.partial(ta_kernel, Ca=Ca)
    full2d = lambda b: (0, 0)

    out = pl.pallas_call(
        kernel,
        out_shape=jax.ShapeDtypeStruct((nsteps, R, C), jnp.float32),
        grid=(nsteps,),
        in_specs=[
            pl.BlockSpec((1, R, C), lambda b: (b, 0, 0)),          # x slab
            pl.BlockSpec((C, 3 * Ca), full2d),                     # W_qkv
            pl.BlockSpec((1, 3 * Ca), full2d),                     # b_qkv
            pl.BlockSpec((Ca, C), full2d),                         # gamma*W_fc^T
            pl.BlockSpec((1, C), full2d),                          # gamma*b_fc
            pl.BlockSpec((R, R), full2d),                          # additive mask
        ],
        out_specs=pl.BlockSpec((1, R, C), lambda b: (b, 0, 0)),
        compiler_params=pltpu.CompilerParams(
            dimension_semantics=("parallel",)),
    )(x_flat, wqkv, bqkv, wfcg, bfcg, addmask)

    return out.reshape(B, Vn, L, C)


def ta_reference(x, params):
    """Pure-JAX mirror of the PyTorch forward, for verification."""
    B, Vn, L, C = x.shape
    hp = jax.lax.Precision.HIGHEST
    mask = jnp.triu(jnp.ones((L, L), jnp.float32), k=1) * 1e10
    Q = jnp.matmul(x, params["Q_weights"], precision=hp) + params["Q_bais"]
    K = jnp.matmul(x, params["K_weights"], precision=hp) + params["K_bais"]
    V = jnp.matmul(x, params["V_weights"], precision=hp) + params["V_bais"]
    scores = jnp.einsum("bvlc,bvmc->bvlm", Q, K, precision=hp) - mask
    alpha = jax.nn.softmax(scores, axis=3)
    Va = jnp.einsum("bvlm,bvmc->bvlc", alpha, V, precision=hp)
    fc = jnp.matmul(Va, params["fc_weight"].T, precision=hp) + params["fc_bias"]
    return x + fc * params["gama"][0]


if __name__ == "__main__":
    # Small shapes implied by the module: X is (batch, v, L, C).
    B, Vn, L, C, Ca = 2, 4, 8, 32, 16

    key = jax.random.PRNGKey(0)
    ks = jax.random.split(key, 10)
    # Parameter magnitudes scaled to keep the toy test well-conditioned
    # (semantics identical to the module; only the example values differ).
    params = {
        "Q_weights": jax.random.normal(ks[0], (C, Ca), jnp.float32) / jnp.sqrt(C),
        "K_weights": jax.random.normal(ks[1], (C, Ca), jnp.float32) / jnp.sqrt(C),
        "V_weights": jax.random.normal(ks[2], (C, Ca), jnp.float32) / jnp.sqrt(C),
        "Q_bais":    jax.random.normal(ks[3], (Ca,), jnp.float32),
        "K_bais":    jax.random.normal(ks[4], (Ca,), jnp.float32),
        "V_bais":    jax.random.normal(ks[5], (Ca,), jnp.float32),
        "gama":      jax.random.normal(ks[6], (1,), jnp.float32),
        # nn.Linear(C_alpha, C): weight (C, Ca), bias (C,)
        "fc_weight": jax.random.normal(ks[7], (C, Ca), jnp.float32) / jnp.sqrt(Ca),
        "fc_bias":   jax.random.normal(ks[8], (C,), jnp.float32),
    }
    x = jax.random.normal(ks[9], (B, Vn, L, C), jnp.float32)

    out = jax.block_until_ready(ta_forward(x, params))
    ref = jax.block_until_ready(ta_reference(x, params))

    assert out.shape == (B, Vn, L, C)
    max_diff = float(jnp.max(jnp.abs(out - ref)))
    assert jnp.allclose(out, ref, rtol=1e-3, atol=1e-3), \
        f"max abs diff {max_diff}"
    print("KERNEL_OK")
</pallas_src>

<mosaic_0001>
module attributes {stable_mosaic.version = 11 : i64} {
  func.func @ta_kernel(%arg0: i32, %arg1: memref<1x32x32xf32, #tpu.memory_space<vmem>>, %arg2: memref<32x48xf32, #tpu.memory_space<vmem>>, %arg3: memref<1x48xf32, #tpu.memory_space<vmem>>, %arg4: memref<16x32xf32, #tpu.memory_space<vmem>>, %arg5: memref<1x32xf32, #tpu.memory_space<vmem>>, %arg6: memref<32x32xf32, #tpu.memory_space<vmem>>, %arg7: memref<1x32x32xf32, #tpu.memory_space<vmem>>) attributes {dimension_semantics = [#tpu.dimension_semantics<parallel>], iteration_bounds = array<i64: 2>, scalar_prefetch = 0 : i64, scratch_operands = 0 : i64, tpu.core_type = #tpu.core_type<tc>, window_params = [{transform_indices = @transform_0, window_bounds = array<i64: 1, 32, 32>}, {pipeline_mode = #tpu.pipeline_mode<synchronous>, transform_indices = @transform_1, window_bounds = array<i64: 32, 48>}, {pipeline_mode = #tpu.pipeline_mode<synchronous>, transform_indices = @transform_2, window_bounds = array<i64: 1, 48>}, {pipeline_mode = #tpu.pipeline_mode<synchronous>, transform_indices = @transform_3, window_bounds = array<i64: 16, 32>}, {pipeline_mode = #tpu.pipeline_mode<synchronous>, transform_indices = @transform_4, window_bounds = array<i64: 1, 32>}, {pipeline_mode = #tpu.pipeline_mode<synchronous>, transform_indices = @transform_5, window_bounds = array<i64: 32, 32>}, {transform_indices = @transform_6, window_bounds = array<i64: 1, 32, 32>}]} {
    %c0 = arith.constant 0 : index
    %c0_0 = arith.constant 0 : index
    %c0_1 = arith.constant 0 : index
    %0 = vector.load %arg1[%c0, %c0_0, %c0_1] : memref<1x32x32xf32, #tpu.memory_space<vmem>>, vector<1x32x32xf32>
    %1 = vector.shape_cast %0 : vector<1x32x32xf32> to vector<32x32xf32>
    %c0_2 = arith.constant 0 : index
    %c0_3 = arith.constant 0 : index
    %2 = vector.load %arg2[%c0_2, %c0_3] : memref<32x48xf32, #tpu.memory_space<vmem>>, vector<32x48xf32>
    %cst = arith.constant dense<0.000000e+00> : vector<32x48xf32>
    %3 = tpu.matmul %1, %2, %cst {dimension_numbers = #tpu.dot_dimension_numbers<[1], [0], [0], [1], [0, 0, 1, 1], [], []>} : vector<32x32xf32>, vector<32x48xf32>, vector<32x48xf32> -> vector<32x48xf32>
    %c0_4 = arith.constant 0 : index
    %c0_5 = arith.constant 0 : index
    %4 = vector.load %arg3[%c0_4, %c0_5] : memref<1x48xf32, #tpu.memory_space<vmem>>, vector<1x48xf32>
    %5 = vector.broadcast %4 : vector<1x48xf32> to vector<32x48xf32>
    %6 = arith.addf %3, %5 : vector<32x48xf32>
    %7 = vector.extract_strided_slice %6 {offsets = [0, 0], sizes = [32, 16], strides = [1, 1]} : vector<32x48xf32> to vector<32x16xf32>
    %8 = vector.extract_strided_slice %6 {offsets = [0, 16], sizes = [32, 16], strides = [1, 1]} : vector<32x48xf32> to vector<32x16xf32>
    %9 = vector.extract_strided_slice %6 {offsets = [0, 32], sizes = [32, 16], strides = [1, 1]} : vector<32x48xf32> to vector<32x16xf32>
    "tpu.trace_start"() <{level = 10 : i32, message = "ld,md->lm"}> : () -> ()
    %cst_6 = arith.constant dense<0.000000e+00> : vector<32x32xf32>
    %10 = tpu.matmul %7, %8, %cst_6 {dimension_numbers = #tpu.dot_dimension_numbers<[1], [1], [0], [0], [0, 0, 1, 0], [], []>} : vector<32x16xf32>, vector<32x16xf32>, vector<32x32xf32> -> vector<32x32xf32>
    "tpu.trace_stop"() : () -> ()
    %c0_7 = arith.constant 0 : index
    %c0_8 = arith.constant 0 : index
    %11 = vector.load %arg6[%c0_7, %c0_8] : memref<32x32xf32, #tpu.memory_space<vmem>>, vector<32x32xf32>
    %12 = arith.subf %10, %11 : vector<32x32xf32>
    %cst_9 = arith.constant dense<0xFF800000> : vector<32xf32>
    %13 = vector.multi_reduction <maximumf>, %12, %cst_9 [1] : vector<32x32xf32> to vector<32xf32>
    %14 = vector.shape_cast %13 : vector<32xf32> to vector<32x1xf32>
    %15 = vector.broadcast %14 : vector<32x1xf32> to vector<32x32xf32>
    %16 = arith.subf %12, %15 : vector<32x32xf32>
    %17 = math.exp %16 : vector<32x32xf32>
    %cst_10 = arith.constant dense<0.000000e+00> : vector<32xf32>
    %18 = vector.multi_reduction <add>, %17, %cst_10 [1] : vector<32x32xf32> to vector<32xf32>
    %19 = vector.shape_cast %18 : vector<32xf32> to vector<32x1xf32>
    %20 = tpu.reciprocal %19 : vector<32x1xf32> -> vector<32x1xf32>
    %21 = vector.broadcast %20 : vector<32x1xf32> to vector<32x32xf32>
    %22 = arith.mulf %17, %21 : vector<32x32xf32>
    %cst_11 = arith.constant dense<0.000000e+00> : vector<32x16xf32>
    %23 = tpu.matmul %22, %9, %cst_11 {dimension_numbers = #tpu.dot_dimension_numbers<[1], [0], [0], [1], [0, 0, 1, 1], [], []>} : vector<32x32xf32>, vector<32x16xf32>, vector<32x16xf32> -> vector<32x16xf32>
    %c0_12 = arith.constant 0 : index
    %c0_13 = arith.constant 0 : index
    %24 = vector.load %arg4[%c0_12, %c0_13] : memref<16x32xf32, #tpu.memory_space<vmem>>, vector<16x32xf32>
    %cst_14 = arith.constant dense<0.000000e+00> : vector<32x32xf32>
    %25 = tpu.matmul %23, %24, %cst_14 {dimension_numbers = #tpu.dot_dimension_numbers<[1], [0], [0], [1], [0, 0, 1, 1], [], []>} : vector<32x16xf32>, vector<16x32xf32>, vector<32x32xf32> -> vector<32x32xf32>
    %c0_15 = arith.constant 0 : index
    %c0_16 = arith.constant 0 : index
    %26 = vector.load %arg5[%c0_15, %c0_16] : memref<1x32xf32, #tpu.memory_space<vmem>>, vector<1x32xf32>
    %27 = vector.broadcast %26 : vector<1x32xf32> to vector<32x32xf32>
    %28 = arith.addf %25, %27 : vector<32x32xf32>
    %29 = arith.addf %1, %28 : vector<32x32xf32>
    %c0_17 = arith.constant 0 : index
    %c0_18 = arith.constant 0 : index
    %c0_19 = arith.constant 0 : index
    %30 = vector.load %arg7[%c0_17, %c0_18, %c0_19] : memref<1x32x32xf32, #tpu.memory_space<vmem>>, vector<1x32x32xf32>
    %31 = vector.shape_cast %30 : vector<1x32x32xf32> to vector<32x32xf32>
    %32 = vector.shape_cast %29 : vector<32x32xf32> to vector<1x32x32xf32>
    tpu.vector_store %arg7[%c0_17, %c0_18, %c0_19], %32 {strides = array<i32>} : memref<1x32x32xf32, #tpu.memory_space<vmem>>, vector<1x32x32xf32>,
    return
  }
  func.func @transform_0(%arg0: i32) -> (i32, i32, i32) {
    %c0_i32 = arith.constant 0 : i32
    %c0_i32_0 = arith.constant 0 : i32
    %c0_i32_1 = arith.constant 0 : i32
    return %arg0, %c0_i32, %c0_i32_0 : i32, i32, i32
  }
  func.func @transform_1(%arg0: i32) -> (i32, i32) {
    %c0_i32 = arith.constant 0 : i32
    %c0_i32_0 = arith.constant 0 : i32
    %c0_i32_1 = arith.constant 0 : i32
    return %c0_i32, %c0_i32_0 : i32, i32
  }
  func.func @transform_2(%arg0: i32) -> (i32, i32) {
    %c0_i32 = arith.constant 0 : i32
    %c0_i32_0 = arith.constant 0 : i32
    %c0_i32_1 = arith.constant 0 : i32
    return %c0_i32, %c0_i32_0 : i32, i32
  }
  func.func @transform_3(%arg0: i32) -> (i32, i32) {
    %c0_i32 = arith.constant 0 : i32
    %c0_i32_0 = arith.constant 0 : i32
    %c0_i32_1 = arith.constant 0 : i32
    return %c0_i32, %c0_i32_0 : i32, i32
  }
  func.func @transform_4(%arg0: i32) -> (i32, i32) {
    %c0_i32 = arith.constant 0 : i32
    %c0_i32_0 = arith.constant 0 : i32
    %c0_i32_1 = arith.constant 0 : i32
    return %c0_i32, %c0_i32_0 : i32, i32
  }
  func.func @transform_5(%arg0: i32) -> (i32, i32) {
    %c0_i32 = arith.constant 0 : i32
    %c0_i32_0 = arith.constant 0 : i32
    %c0_i32_1 = arith.constant 0 : i32
    return %c0_i32, %c0_i32_0 : i32, i32
  }
  func.func @transform_6(%arg0: i32) -> (i32, i32, i32) {
    %c0_i32 = arith.constant 0 : i32
    %c0_i32_0 = arith.constant 0 : i32
    %c0_i32_1 = arith.constant 0 : i32
    return %arg0, %c0_i32, %c0_i32_0 : i32, i32, i32
  }
}

</mosaic_0001>

<llo_original>
// kernel: tpu_custom_call.1
$region0: #{tpu_custom_call.1}
  #allocation0 [shape = 'u32[]', space=smem, size = 0x4, offset = 0x4, fixed_abs, tag = 'smem constant byte address 0x4 - core index']
  #allocation1 [shape = 'u32[144,128]{1,0:T(1,128)}', space=vmem, size = 0x12000, scoped, tag = 'internal scratch']
  %s0 = inlined_call_operand.hbm [shape: f32[2,32,32], index: 0, kind: input, shape index: {}]
  %s1 = inlined_call_operand.hbm [shape: f32[32,48], index: 1, kind: input, shape index: {}]
  %s2 = inlined_call_operand.vmem [shape: f32[1,48], index: 2, kind: input, shape index: {}]
  %s3 = inlined_call_operand.hbm [shape: f32[16,32], index: 3, kind: input, shape index: {}]
  %s4 = inlined_call_operand.vmem [shape: f32[1,32], index: 4, kind: input, shape index: {}]
  %s5 = inlined_call_operand.hbm [shape: f32[32,32], index: 5, kind: input, shape index: {}]
  %s6 = inlined_call_operand.hbm [shape: f32[2,32,32], index: 6, kind: output, shape index: {}]
  %s7 = sld [smem:[#allocation0]]
  $region73: #{tpu_custom_call.1} parent=0
    _
  %s9 = ssub.s32 1, %s7
  %s10 = scalar_select 0, %s9, %s7
  $region1: #{tpu_custom_call.1} parent=0
    #allocation2 [shape = 'u8[32768]{0}', space=vmem, size = 0x8000, scoped, tag = 'input window, operand 0']
    #allocation3 [shape = 's32[2]{0}', space=sflag, size = 0x8, scoped, tag = 'scoped memory for tpu_custom_call.1']
    #allocation4 [shape = 's32[2]{0}', space=sflag, size = 0x8, scoped, tag = 'scoped memory for tpu_custom_call.1']
    #allocation5 [shape = 'u8[16384]{0}', space=vmem, size = 0x4000, scoped, tag = 'input window, operand 1, single buffered']
    #allocation6 [shape = 's32[1]{0}', space=sflag, size = 0x4, scoped, tag = 'scoped memory for tpu_custom_call.1']
    #allocation7 [shape = 'u8[8192]{0}', space=vmem, size = 0x2000, scoped, tag = 'input window, operand 3, single buffered']
    #allocation8 [shape = 'u8[16384]{0}', space=vmem, size = 0x4000, scoped, tag = 'input window, operand 5, single buffered']
    #allocation9 [shape = 's32[1]{0}', space=sflag, size = 0x4, scoped, tag = 'scoped memory for tpu_custom_call.1']
    #allocation10 [shape = 'u8[32768]{0}', space=vmem, size = 0x8000, scoped, tag = 'output window, operand 0']
    %11 = vsyncpa [#allocation3], 0
    %s12 = scalar_lea.sflag [#allocation3], 1
    %13 = vsyncpa %s12, 0
    %14 = vsyncpa [#allocation6], 0
    %15 = vsyncpa [#allocation9], 0
    %16 = vsyncpa [#allocation4], 0
    %s17 = scalar_lea.sflag [#allocation4], 1
    %18 = vsyncpa %s17, 0
    loop: start=0, step=1, limit=4
    $region2: #{tpu_custom_call.1} parent=1 // loop_pre_header
      _
    $region3: #{tpu_custom_call.1} parent=1 // loop_header
      %s20 = sphi 0, %s24
      %p21 = scmp.ge.s32.totalorder %s20, 4
      %s30 = sphi 0, %s32
      %s33 = sphi 0, %s30
      %s34 = sphi 0, %s33
      %s50 = sphi 0, %s34
      %s54 = sphi 0, %s54
      %s56 = sphi 0, %s54
      %s57 = sphi 0, %s56
      %s71 = sphi 0, %s57
      %s75 = sphi 0, %s75
      %s77 = sphi 0, %s75
      %s78 = sphi 0, %s77
      %s92 = sphi 0, %s78
      %s96 = sphi 0, %s96
      %s98 = sphi 0, %s96
      %s99 = sphi 0, %s98
      %s113 = sphi 0, %s99
      %s117 = sphi 0, %s117
      %s119 = sphi 0, %s117
      %s120 = sphi 0, %s119
      %s134 = sphi 0, %s120
      %s138 = sphi 0, %s138
      %s140 = sphi 0, %s138
      %s141 = sphi 0, %s140
      %s155 = sphi 0, %s141
      %s161 = sphi 0, %s163
      %s164 = sphi 0, %s161
      %s165 = sphi 0, %s164
      %s181 = sphi 0, %s165
    $region4: #{tpu_custom_call.1} parent=1 // loop_header_branch
      %23 = sbr.rel (%p21) target = $region8
    $region5: #{tpu_custom_call.1} parent=1 // loop_body
      %s25 = ssub.s32 %s20, 1
      %s26 = ssub.s32 %s20, 2
      %s27 = sadd.s32 %s20, 1
      %s28 = ssub.s32 %s20, %s27
      %p29 = scmp.eq.s32.totalorder %s28, 0
      %s31 = sadd.s32 %s30, 1
      %s32 = scalar_select %p29, %s30, %s31
      %p35 = pneg %p29
      %p36 = scmp.eq.s32.totalorder %s20, 1
      %p37 = por %p35, %p36
      %p38 = scmp.ne.s32.totalorder %s30, %s33
      %p39 = scmp.eq.s32.totalorder %s20, 0
      %p40 = por %p38, %p39
      %p41 = scmp.ne.s32.totalorder %s30, %s33
      %p42 = scmp.eq.s32.totalorder %s25, 1
      %p43 = por %p41, %p42
      %p44 = scmp.ne.s32.totalorder %s33, %s34
      %p45 = scmp.eq.s32.totalorder %s25, 0
      %p46 = por %p44, %p45
      %p47 = scmp.ne.s32.totalorder %s33, %s34
      %p48 = scmp.eq.s32.totalorder %s26, 1
      %p49 = por %p47, %p48
      %p51 = scmp.ne.s32.totalorder %s34, %s50
      %p52 = scmp.eq.s32.totalorder %s26, 0
      %p53 = por %p51, %p52
      %s55 = sadd.s32 %s54, 1
      %p58 = scmp.eq.s32.totalorder %s20, 1
      %p59 = scmp.ne.s32.totalorder %s54, %s56
      %p60 = scmp.eq.s32.totalorder %s20, 0
      %p61 = por %p59, %p60
      %p62 = scmp.ne.s32.totalorder %s54, %s56
      %p63 = scmp.eq.s32.totalorder %s25, 1
      %p64 = por %p62, %p63
      %p65 = scmp.ne.s32.totalorder %s56, %s57
      %p66 = scmp.eq.s32.totalorder %s25, 0
      %p67 = por %p65, %p66
      %p68 = scmp.ne.s32.totalorder %s56, %s57
      %p69 = scmp.eq.s32.totalorder %s26, 1
      %p70 = por %p68, %p69
      %p72 = scmp.ne.s32.totalorder %s57, %s71
      %p73 = scmp.eq.s32.totalorder %s26, 0
      %p74 = por %p72, %p73
      %s76 = sadd.s32 %s75, 1
      %p79 = scmp.eq.s32.totalorder %s20, 1
      %p80 = scmp.ne.s32.totalorder %s75, %s77
      %p81 = scmp.eq.s32.totalorder %s20, 0
      %p82 = por %p80, %p81
      %p83 = scmp.ne.s32.totalorder %s75, %s77
      %p84 = scmp.eq.s32.totalorder %s25, 1
      %p85 = por %p83, %p84
      %p86 = scmp.ne.s32.totalorder %s77, %s78
      %p87 = scmp.eq.s32.totalorder %s25, 0
      %p88 = por %p86, %p87
      %p89 = scmp.ne.s32.totalorder %s77, %s78
      %p90 = scmp.eq.s32.totalorder %s26, 1
      %p91 = por %p89, %p90
      %p93 = scmp.ne.s32.totalorder %s78, %s92
      %p94 = scmp.eq.s32.totalorder %s26, 0
      %p95 = por %p93, %p94
      %s97 = sadd.s32 %s96, 1
      %p100 = scmp.eq.s32.totalorder %s20, 1
      %p101 = scmp.ne.s32.totalorder %s96, %s98
      %p102 = scmp.eq.s32.totalorder %s20, 0
      %p103 = por %p101, %p102
      %p104 = scmp.ne.s32.totalorder %s96, %s98
      %p105 = scmp.eq.s32.totalorder %s25, 1
      %p106 = por %p104, %p105
      %p107 = scmp.ne.s32.totalorder %s98, %s99
      %p108 = scmp.eq.s32.totalorder %s25, 0
      %p109 = por %p107, %p108
      %p110 = scmp.ne.s32.totalorder %s98, %s99
      %p111 = scmp.eq.s32.totalorder %s26, 1
      %p112 = por %p110, %p111
      %p114 = scmp.ne.s32.totalorder %s99, %s113
      %p115 = scmp.eq.s32.totalorder %s26, 0
      %p116 = por %p114, %p115
      %s118 = sadd.s32 %s117, 1
      %p121 = scmp.eq.s32.totalorder %s20, 1
      %p122 = scmp.ne.s32.totalorder %s117, %s119
      %p123 = scmp.eq.s32.totalorder %s20, 0
      %p124 = por %p122, %p123
      %p125 = scmp.ne.s32.totalorder %s117, %s119
      %p126 = scmp.eq.s32.totalorder %s25, 1
      %p127 = por %p125, %p126
      %p128 = scmp.ne.s32.totalorder %s119, %s120
      %p129 = scmp.eq.s32.totalorder %s25, 0
      %p130 = por %p128, %p129
      %p131 = scmp.ne.s32.totalorder %s119, %s120
      %p132 = scmp.eq.s32.totalorder %s26, 1
      %p133 = por %p131, %p132
      %p135 = scmp.ne.s32.totalorder %s120, %s134
      %p136 = scmp.eq.s32.totalorder %s26, 0
      %p137 = por %p135, %p136
      %s139 = sadd.s32 %s138, 1
      %p142 = scmp.eq.s32.totalorder %s20, 1
      %p143 = scmp.ne.s32.totalorder %s138, %s140
      %p144 = scmp.eq.s32.totalorder %s20, 0
      %p145 = por %p143, %p144
      %p146 = scmp.ne.s32.totalorder %s138, %s140
      %p147 = scmp.eq.s32.totalorder %s25, 1
      %p148 = por %p146, %p147
      %p149 = scmp.ne.s32.totalorder %s140, %s141
      %p150 = scmp.eq.s32.totalorder %s25, 0
      %p151 = por %p149, %p150
      %p152 = scmp.ne.s32.totalorder %s140, %s141
      %p153 = scmp.eq.s32.totalorder %s26, 1
      %p154 = por %p152, %p153
      %p156 = scmp.ne.s32.totalorder %s141, %s155
      %p157 = scmp.eq.s32.totalorder %s26, 0
      %p158 = por %p156, %p157
      %s159 = ssub.s32 %s20, %s27
      %p160 = scmp.eq.s32.totalorder %s159, 0
      %s162 = sadd.s32 %s161, 1
      %s163 = scalar_select %p160, %s161, %s162
      %p166 = pneg %p160
      %p167 = scmp.eq.s32.totalorder %s20, 1
      %p168 = por %p166, %p167
      %p169 = scmp.ne.s32.totalorder %s161, %s164
      %p170 = scmp.eq.s32.totalorder %s20, 0
      %p171 = por %p169, %p170
      %p172 = scmp.ne.s32.totalorder %s161, %s164
      %p173 = scmp.eq.s32.totalorder %s25, 1
      %p174 = por %p172, %p173
      %p175 = scmp.ne.s32.totalorder %s164, %s165
      %p176 = scmp.eq.s32.totalorder %s25, 0
      %p177 = por %p175, %p176
      %p178 = scmp.ne.s32.totalorder %s164, %s165
      %p179 = scmp.eq.s32.totalorder %s26, 1
      %p180 = por %p178, %p179
      %p182 = scmp.ne.s32.totalorder %s165, %s181
      %p183 = scmp.eq.s32.totalorder %s26, 0
      %p184 = por %p182, %p183
      %p185 = scmp.le.s32.totalorder 1, %s20
      %p186 = scmp.lt.s32.totalorder %s20, 3
      %p187 = pnand %p185, %p186
      %p188 = pneg %p187
      // Predicated region
      $region9: #{tpu_custom_call.1} parent=5 // pred_check
        _
      $region10: #{tpu_custom_call.1} parent=5 // pred_check_branch
        %190 = sbr.rel (%p187) target = $region12
      $region11: #{tpu_custom_call.1} parent=5 // pred_region
        %s191 = ssub.s32 %s20, 1
        // Predicated region
        $region13: #{tpu_custom_call.1} parent=11 // pred_check
          %p192 = pneg %p67
        $region14: #{tpu_custom_call.1} parent=11 // pred_check_branch
          %194 = sbr.rel (%p192) target = $region16
        $region15: #{tpu_custom_call.1} parent=11 // pred_region
          %s196 = ssub.s32 512, 512
          %197 = vsyncadd [#allocation6], %s196
          %s198 = sshll.u32 [#allocation5], 4
          %s199 = int_to_ptr.vmem [resolvable:$true] %s198
          %204 = dma.hbm_to_vmem [thread:$0]  %s1, 512, %s199, [#allocation6], 128, 128, 8
        $region16: #{tpu_custom_call.1} parent=11 // pred_fallthru
          _
        // Predicated region
        $region17: #{tpu_custom_call.1} parent=11 // pred_check
          %p205 = pneg %p88
        $region18: #{tpu_custom_call.1} parent=11 // pred_check_branch
          %207 = sbr.rel (%p205) target = $region20
        $region19: #{tpu_custom_call.1} parent=11 // pred_region
          _
        $region20: #{tpu_custom_call.1} parent=11 // pred_fallthru
          _
        // Predicated region
        $region21: #{tpu_custom_call.1} parent=11 // pred_check
          %p208 = pneg %p109
        $region22: #{tpu_custom_call.1} parent=11 // pred_check_branch
          %210 = sbr.rel (%p208) target = $region24
        $region23: #{tpu_custom_call.1} parent=11 // pred_region
          %s212 = ssub.s32 256, 256
          %213 = vsyncadd [#allocation6], %s212
          %s214 = sshll.u32 [#allocation7], 4
          %s215 = int_to_ptr.vmem [resolvable:$true] %s214
          %220 = dma.hbm_to_vmem [thread:$0]  %s3, 256, %s215, [#allocation6], 128, 128, 8
        $region24: #{tpu_custom_call.1} parent=11 // pred_fallthru
          _
        // Predicated region
        $region25: #{tpu_custom_call.1} parent=11 // pred_check
          %p221 = pneg %p130
        $region26: #{tpu_custom_call.1} parent=11 // pred_check_branch
          %223 = sbr.rel (%p221) target = $region28
        $region27: #{tpu_custom_call.1} parent=11 // pred_region
          _
        $region28: #{tpu_custom_call.1} parent=11 // pred_fallthru
          _
        // Predicated region
        $region29: #{tpu_custom_call.1} parent=11 // pred_check
          %p224 = pneg %p151
        $region30: #{tpu_custom_call.1} parent=11 // pred_check_branch
          %226 = sbr.rel (%p224) target = $region32
        $region31: #{tpu_custom_call.1} parent=11 // pred_region
          %s228 = ssub.s32 512, 512
          %229 = vsyncadd [#allocation9], %s228
          %s230 = sshll.u32 [#allocation8], 4
          %s231 = int_to_ptr.vmem [resolvable:$true] %s230
          %236 = dma.hbm_to_vmem [thread:$0]  %s5, 512, %s231, [#allocation9], 128, 128, 8
        $region32: #{tpu_custom_call.1} parent=11 // pred_fallthru
          _
      $region12: #{tpu_custom_call.1} parent=5 // pred_fallthru
        _
      %p237 = scmp.lt.s32.totalorder %s20, 2
      // Predicated region
      $region33: #{tpu_custom_call.1} parent=5 // pred_check
        %p238 = pneg %p237
      $region34: #{tpu_custom_call.1} parent=5 // pred_check_branch
        %240 = sbr.rel (%p238) target = $region36
      $region35: #{tpu_custom_call.1} parent=5 // pred_region
        // Predicated region
        $region37: #{tpu_custom_call.1} parent=35 // pred_check
          %p241 = pneg %p40
        $region38: #{tpu_custom_call.1} parent=35 // pred_check_branch
          %243 = sbr.rel (%p241) target = $region40
        $region39: #{tpu_custom_call.1} parent=35 // pred_region
          %s244 = sand.u32 %s30, 1
          %s245 = scalar_lea.sflag [#allocation3], %s244
          %s246 = sand.u32 %s30, 1
          %s247 = smul.addr %s246, 32
          %s248 = scalar_lea.vmem [#allocation2], %s247
          %s250 = ssub.s32 512, 512
          %251 = vsyncadd %s245, %s250
          %s252 = smul.addr %s20, 4
          %s253 = smul.addr %s252, 128
          %s254 = scalar_lea.hbm %s0, %s253
          %s255 = sshll.u32 %s248, 4
          %s256 = int_to_ptr.vmem [resolvable:$true] %s255
          %261 = dma.hbm_to_vmem [thread:$0]  %s254, 512, %s256, %s245, 128, 128, 8
        $region40: #{tpu_custom_call.1} parent=35 // pred_fallthru
          _
      $region36: #{tpu_custom_call.1} parent=5 // pred_fallthru
        _
      %p262 = scmp.le.s32.totalorder 1, %s20
      %p263 = scmp.lt.s32.totalorder %s20, 3
      %p264 = pnand %p262, %p263
      %p265 = pneg %p264
      // Predicated region
      $region41: #{tpu_custom_call.1} parent=5 // pred_check
        _
      $region42: #{tpu_custom_call.1} parent=5 // pred_check_branch
        %267 = sbr.rel (%p264) target = $region44
      $region43: #{tpu_custom_call.1} parent=5 // pred_region
        %s268 = ssub.s32 %s20, 1
        %s269 = sand.u32 %s33, 1
        %s270 = scalar_lea.sflag [#allocation3], %s269
        %s271 = sand.u32 %s33, 1
        %s272 = smul.addr %s271, 32
        %s273 = scalar_lea.vmem [#allocation2], %s272
        // Predicated region
        $region45: #{tpu_custom_call.1} parent=43 // pred_check
          %p274 = pneg %p46
        $region46: #{tpu_custom_call.1} parent=43 // pred_check_branch
          %276 = sbr.rel (%p274) target = $region48
        $region47: #{tpu_custom_call.1} parent=43 // pred_region
          %277 = dma.done %s270, 512
        $region48: #{tpu_custom_call.1} parent=43 // pred_fallthru
          _
        // Predicated region
        $region49: #{tpu_custom_call.1} parent=43 // pred_check
          %p278 = pneg %p67
        $region50: #{tpu_custom_call.1} parent=43 // pred_check_branch
          %280 = sbr.rel (%p278) target = $region52
        $region51: #{tpu_custom_call.1} parent=43 // pred_region
          %281 = dma.done [#allocation6], 512
        $region52: #{tpu_custom_call.1} parent=43 // pred_fallthru
          _
        // Predicated region
        $region53: #{tpu_custom_call.1} parent=43 // pred_check
          %p282 = pneg %p109
        $region54: #{tpu_custom_call.1} parent=43 // pred_check_branch
          %284 = sbr.rel (%p282) target = $region56
        $region55: #{tpu_custom_call.1} parent=43 // pred_region
          %285 = dma.done [#allocation6], 256
        $region56: #{tpu_custom_call.1} parent=43 // pred_fallthru
          _
        // Predicated region
        $region57: #{tpu_custom_call.1} parent=43 // pred_check
          %p286 = pneg %p151
        $region58: #{tpu_custom_call.1} parent=43 // pred_check_branch
          %288 = sbr.rel (%p286) target = $region60
        $region59: #{tpu_custom_call.1} parent=43 // pred_region
          %289 = dma.done [#allocation9], 512
        $region60: #{tpu_custom_call.1} parent=43 // pred_fallthru
          _
        %s290 = sand.u32 %s33, 1
        %s291 = scalar_lea.sflag [#allocation3], %s290
        %s292 = sand.u32 %s33, 1
        %s293 = smul.addr %s292, 32
        %s294 = scalar_lea.vmem [#allocation2], %s293
        %p295 = pneg %p46
        %p296 = pneg %p43
        %p297 = pneg %p67
        %p298 = pneg %p64
        %p299 = pneg %p88
        %p300 = pneg %p85
        %p301 = pneg %p109
        %p302 = pneg %p106
        %p303 = pneg %p130
        %p304 = pneg %p127
        %p305 = pneg %p151
        %p306 = pneg %p148
        %p307 = pneg %p177
        %p308 = pneg %p174
        %s309 = sand.u32 %s164, 1
        %s310 = scalar_lea.sflag [#allocation4], %s309
        %s311 = sand.u32 %s164, 1
        %s312 = smul.addr %s311, 32
        %s313 = scalar_lea.vmem [#allocation10], %s312
        %v314 = vld [vmem:[%s273] sm:$0xff]
        %v315 = vld [vmem:[%s273 + $0x8] sm:$0xff]
        %v316 = vld [vmem:[%s273 + $0x10] sm:$0xff]
        %v317 = vld [vmem:[%s273 + $0x18] sm:$0xff]
        %v318 = vld [vmem:[#allocation5] sm:$0xff]
        %v319 = vld [vmem:[#allocation5 + $0x8] sm:$0xff]
        %v320 = vld [vmem:[#allocation5 + $0x10] sm:$0xff]
        %v321 = vld [vmem:[#allocation5 + $0x18] sm:$0xff]
        %v322 = vld [vmem:[%s2] sm:$0x1]
        %v324 = vlaneseq
        %v325 = vshrl.u32 %v324, 7
        %v326 = vsub.s32 0, %v325
        %v327 = vrot.slane %v322, %v326
        %vm329 = vcmask 261120
        %v331 = vsel %vm329, %v314, 0
        %v334 = vsel %vm329, %v315, 0
        %v337 = vsel %vm329, %v316, 0
        %v340 = vsel %vm329, %v317, 0
        %342 = vmatprep.subr.mxu0 0.0
        %343 = vmatpush1.msra.mxu0 %v318
        %344 = vmatprep.subr.mxu0 0.0
        %345 = vmatpush1.msra.mxu0 %v319
        %346 = vmatprep.subr.mxu0 0.0
        %347 = vmatpush1.msra.mxu0 %v320
        %348 = vmatprep.subr.mxu0 0.0
        %349 = vmatpush1.msra.mxu0 %v321
        %350 = vmatprep.subr.mxu0 0.0
        %351 = vmatpush1.msra.mxu0 0.0
        %352 = vmatprep.subr.mxu0 0.0
        %353 = vmatpush1.msra.mxu0 0.0
        %354 = vmatprep.subr.mxu0 0.0
        %355 = vmatpush1.msra.mxu0 0.0
        %356 = vmatprep.subr.mxu0 0.0
        %357 = vmatpush1.msra.mxu0 0.0
        %358 = vmatprep.subr.mxu0 0.0
        %359 = vmatpush1.msra.mxu0 0.0
        %360 = vmatprep.subr.mxu0 0.0
        %361 = vmatpush1.msra.mxu0 0.0
        %362 = vmatprep.subr.mxu0 0.0
        %363 = vmatpush1.msra.mxu0 0.0
        %364 = vmatprep.subr.mxu0 0.0
        %365 = vmatpush1.msra.mxu0 0.0
        %366 = vmatprep.subr.mxu0 0.0
        %367 = vmatpush1.msra.mxu0 0.0
        %368 = vmatprep.subr.mxu0 0.0
        %369 = vmatpush1.msra.mxu0 0.0
        %370 = vmatprep.subr.mxu0 0.0
        %371 = vmatpush1.msra.mxu0 0.0
        %372 = vmatprep.subr.mxu0 0.0
        %373 = vmatpush1.msra.mxu0 0.0
        %374 = vmatprep.subr.mxu0 0.0
        %375 = vmatpush1.msra.mxu0 0.0
        %376 = vmatprep.subr.mxu0 0.0
        %377 = vmatpush1.msra.mxu0 0.0
        %378 = vmatprep.subr.mxu0 0.0
        %379 = vmatpush1.msra.mxu0 0.0
        %380 = vmatprep.subr.mxu0 0.0
        %381 = vmatpush1.msra.mxu0 0.0
        %382 = vmatprep.subr.mxu0 0.0
        %383 = vmatpush1.msra.mxu0 0.0
        %384 = vmatprep.subr.mxu0 0.0
        %385 = vmatpush1.msra.mxu0 0.0
        %386 = vmatprep.subr.mxu0 0.0
        %387 = vmatpush1.msra.mxu0 0.0
        %388 = vmatprep.subr.mxu0 0.0
        %389 = vmatpush1.msra.mxu0 0.0
        %390 = vmatprep.subr.mxu0 0.0
        %391 = vmatpush1.msra.mxu0 0.0
        %392 = vmatprep.subr.mxu0 0.0
        %393 = vmatpush1.msra.mxu0 0.0
        %394 = vmatprep.subr.mxu0 0.0
        %395 = vmatpush1.msra.mxu0 0.0
        %396 = vmatprep.subr.mxu0 0.0
        %397 = vmatpush1.msra.mxu0 0.0
        %398 = vmatprep.subr.mxu0 0.0
        %399 = vmatpush1.msra.mxu0 0.0
        %400 = vmatprep.subr.mxu0 0.0
        %401 = vmatpush1.msra.mxu0 0.0
        %402 = vmatprep.subr.mxu0 0.0
        %403 = vmatpush1.msra.mxu0 0.0
        %404 = vmatprep.subr.mxu0 0.0
        %405 = vmatpush1.msra.mxu0 0.0
        %406 = vmatprep.mubr.f32.mxu0 0.0
        %407 = vmatmul.mubr.f32.gmra.mrb[0].mxu0 %v331
        %v408 = vpop.f32.mrb[0].mxu0
        %v409 = vadd.f32 %v327, %v408
        %v410 = vpop.f32.mrb[0].mxu0
        %411 = vmatprep.mubr.f32.mxu0 0.0
        %412 = vmatmul.mubr.f32.gmra.mrb[0].mxu0 %v334
        %v413 = vpop.f32.mrb[0].mxu0
        %v414 = vadd.f32 %v327, %v413
        %v415 = vpop.f32.mrb[0].mxu0
        %416 = vmatprep.mubr.f32.mxu0 0.0
        %417 = vmatmul.mubr.f32.gmra.mrb[0].mxu0 %v337
        %v418 = vpop.f32.mrb[0].mxu0
        %v419 = vadd.f32 %v327, %v418
        %v420 = vpop.f32.mrb[0].mxu0
        %421 = vmatprep.mubr.f32.mxu0 0.0
        %422 = vmatmul.mubr.f32.gmra.mrb[0].mxu0 %v340
        %v423 = vpop.f32.mrb[0].mxu0
        %v424 = vadd.f32 %v327, %v423
        %v425 = vpop.f32.mrb[0].mxu0
        %426 = vdwg.mxu0
        %431 = vrot.lane.b32.xlu0 %v409, 112
        %v432 = vpop.permute.xlu0 %431
        %433 = vrot.lane.b32.xlu0 %v414, 112
        %v434 = vpop.permute.xlu0 %433
        %435 = vrot.lane.b32.xlu0 %v419, 112
        %v436 = vpop.permute.xlu0 %435
        %437 = vrot.lane.b32.xlu0 %v424, 112
        %v438 = vpop.permute.xlu0 %437
        %vm439 = vcmask 130048
        %v440 = vsel %vm439, %v409, 0
        %v442 = vsel %vm439, %v414, 0
        %v444 = vsel %vm439, %v419, 0
        %v446 = vsel %vm439, %v424, 0
        %v448 = vsel %vm439, %v432, 0
        %v450 = vsel %vm439, %v434, 0
        %v452 = vsel %vm439, %v436, 0
        %v454 = vsel %vm439, %v438, 0
        %456 = vmatprep.subr.mxu0 0.0
        %457 = vmatpush1.xpose.msra.mxu0 %v448
        %458 = vmatprep.subr.mxu0 0.0
        %459 = vmatpush1.xpose.msra.mxu0 %v450
        %460 = vmatprep.subr.mxu0 0.0
        %461 = vmatpush1.xpose.msra.mxu0 %v452
        %462 = vmatprep.subr.mxu0 0.0
        %463 = vmatpush1.xpose.msra.mxu0 %v454
        %464 = vmatprep.subr.mxu0 0.0
        %465 = vmatpush1.xpose.msra.mxu0 0.0
        %466 = vmatprep.subr.mxu0 0.0
        %467 = vmatpush1.xpose.msra.mxu0 0.0
        %468 = vmatprep.subr.mxu0 0.0
        %469 = vmatpush1.xpose.msra.mxu0 0.0
        %470 = vmatprep.subr.mxu0 0.0
        %471 = vmatpush1.xpose.msra.mxu0 0.0
        %472 = vmatprep.subr.mxu0 0.0
        %473 = vmatpush1.xpose.msra.mxu0 0.0
        %474 = vmatprep.subr.mxu0 0.0
        %475 = vmatpush1.xpose.msra.mxu0 0.0
        %476 = vmatprep.subr.mxu0 0.0
        %477 = vmatpush1.xpose.msra.mxu0 0.0
        %478 = vmatprep.subr.mxu0 0.0
        %479 = vmatpush1.xpose.msra.mxu0 0.0
        %480 = vmatprep.subr.mxu0 0.0
        %481 = vmatpush1.xpose.msra.mxu0 0.0
        %482 = vmatprep.subr.mxu0 0.0
        %483 = vmatpush1.xpose.msra.mxu0 0.0
        %484 = vmatprep.subr.mxu0 0.0
        %485 = vmatpush1.xpose.msra.mxu0 0.0
        %486 = vmatprep.subr.mxu0 0.0
        %487 = vmatpush1.xpose.msra.mxu0 0.0
        %488 = vmatprep.subr.mxu0 0.0
        %489 = vmatpush1.xpose.msra.mxu0 0.0
        %490 = vmatprep.subr.mxu0 0.0
        %491 = vmatpush1.xpose.msra.mxu0 0.0
        %492 = vmatprep.subr.mxu0 0.0
        %493 = vmatpush1.xpose.msra.mxu0 0.0
        %494 = vmatprep.subr.mxu0 0.0
        %495 = vmatpush1.xpose.msra.mxu0 0.0
        %496 = vmatprep.subr.mxu0 0.0
        %497 = vmatpush1.xpose.msra.mxu0 0.0
        %498 = vmatprep.subr.mxu0 0.0
        %499 = vmatpush1.xpose.msra.mxu0 0.0
        %500 = vmatprep.subr.mxu0 0.0
        %501 = vmatpush1.xpose.msra.mxu0 0.0
        %502 = vmatprep.subr.mxu0 0.0
        %503 = vmatpush1.xpose.msra.mxu0 0.0
        %504 = vmatprep.subr.mxu0 0.0
        %505 = vmatpush1.xpose.msra.mxu0 0.0
        %506 = vmatprep.subr.mxu0 0.0
        %507 = vmatpush1.xpose.msra.mxu0 0.0
        %508 = vmatprep.subr.mxu0 0.0
        %509 = vmatpush1.xpose.msra.mxu0 0.0
        %510 = vmatprep.subr.mxu0 0.0
        %511 = vmatpush1.xpose.msra.mxu0 0.0
        %512 = vmatprep.subr.mxu0 0.0
        %513 = vmatpush1.xpose.msra.mxu0 0.0
        %514 = vmatprep.subr.mxu0 0.0
        %515 = vmatpush1.xpose.msra.mxu0 0.0
        %516 = vmatprep.subr.mxu0 0.0
        %517 = vmatpush1.xpose.msra.mxu0 0.0
        %518 = vmatprep.subr.mxu0 0.0
        %519 = vmatpush1.xpose.msra.mxu0 0.0
        %520 = vmatprep.mubr.f32.mxu0 0.0
        %521 = vmatmul.mubr.f32.gmra.mrb[0].mxu0 %v440
        %v522 = vpop.f32.mrb[0].mxu0
        %v523 = vadd.f32 0.0, %v522
        %v524 = vpop.f32.mrb[0].mxu0
        %525 = vmatprep.mubr.f32.mxu0 0.0
        %526 = vmatmul.mubr.f32.gmra.mrb[0].mxu0 %v442
        %v527 = vpop.f32.mrb[0].mxu0
        %v528 = vadd.f32 0.0, %v527
        %v529 = vpop.f32.mrb[0].mxu0
        %530 = vmatprep.mubr.f32.mxu0 0.0
        %531 = vmatmul.mubr.f32.gmra.mrb[0].mxu0 %v444
        %v532 = vpop.f32.mrb[0].mxu0
        %v533 = vadd.f32 0.0, %v532
        %v534 = vpop.f32.mrb[0].mxu0
        %535 = vmatprep.mubr.f32.mxu0 0.0
        %536 = vmatmul.mubr.f32.gmra.mrb[0].mxu0 %v446
        %v537 = vpop.f32.mrb[0].mxu0
        %v538 = vadd.f32 0.0, %v537
        %v539 = vpop.f32.mrb[0].mxu0
        %540 = vdwg.mxu0
        %v541 = vld [vmem:[#allocation8] sm:$0xff]
        %v542 = vld [vmem:[#allocation8 + $0x8] sm:$0xff]
        %v543 = vld [vmem:[#allocation8 + $0x10] sm:$0xff]
        %v544 = vld [vmem:[#allocation8 + $0x18] sm:$0xff]
        %v545 = vsub.f32 %v523, %v541
        %v546 = vsub.f32 %v528, %v542
        %v547 = vsub.f32 %v533, %v543
        %v548 = vsub.f32 %v538, %v544
        %v549 = vsel %vm329, %v545, -inf
        %550 = vmax.xlane.f32.xlu0 %v549
        %v551 = vpop.xlane.xlu0 %550
        %v552 = vsel %vm329, %v546, -inf
        %553 = vmax.xlane.f32.xlu0 %v552
        %v554 = vpop.xlane.xlu0 %553
        %v555 = vsel %vm329, %v547, -inf
        %556 = vmax.xlane.f32.xlu0 %v555
        %v557 = vpop.xlane.xlu0 %556
        %v558 = vsel %vm329, %v548, -inf
        %559 = vmax.xlane.f32.xlu0 %v558
        %v560 = vpop.xlane.xlu0 %559
        %v561 = vsub.f32 %v545, %v551
        %v562 = vsub.f32 %v546, %v554
        %v563 = vsub.f32 %v547, %v557
        %v564 = vsub.f32 %v548, %v560
        %v565 = vmul.f32 %v561, 1.442695
        %v566 = vpow.pop %v565
        %v567 = vmul.f32 %v562, 1.442695
        %v568 = vpow.pop %v567
        %v569 = vmul.f32 %v563, 1.442695
        %v570 = vpow.pop %v569
        %v571 = vmul.f32 %v564, 1.442695
        %v572 = vpow.pop %v571
        %v573 = vsel %vm329, %v566, 0.0
        %574 = vadd.xlane.f32.xlu0 %v573
        %v575 = vpop.xlane.xlu0 %574
        %v576 = vsel %vm329, %v568, 0.0
        %577 = vadd.xlane.f32.xlu0 %v576
        %v578 = vpop.xlane.xlu0 %577
        %v579 = vsel %vm329, %v570, 0.0
        %580 = vadd.xlane.f32.xlu0 %v579
        %v581 = vpop.xlane.xlu0 %580
        %v582 = vsel %vm329, %v572, 0.0
        %583 = vadd.xlane.f32.xlu0 %v582
        %v584 = vpop.xlane.xlu0 %583
        %v585 = vrcp.pop %v575
        %v586 = vrcp.pop %v578
        %v587 = vrcp.pop %v581
        %v588 = vrcp.pop %v584
        %v589 = vmul.f32 %v566, %v585
        %v590 = vmul.f32 %v568, %v586
        %v591 = vmul.f32 %v570, %v587
        %v592 = vmul.f32 %v572, %v588
        %593 = vrot.lane.b32.xlu0 %v409, 96
        %v594 = vpop.permute.xlu0 %593
        %595 = vrot.lane.b32.xlu0 %v414, 96
        %v596 = vpop.permute.xlu0 %595
        %597 = vrot.lane.b32.xlu0 %v419, 96
        %v598 = vpop.permute.xlu0 %597
        %599 = vrot.lane.b32.xlu0 %v424, 96
        %v600 = vpop.permute.xlu0 %599
        %v606 = vsel %vm329, %v589, 0
        %v609 = vsel %vm329, %v590, 0
        %v612 = vsel %vm329, %v591, 0
        %v615 = vsel %vm329, %v592, 0
        %617 = vmatprep.subr.mxu0 0.0
        %618 = vmatpush1.msra.mxu0 %v594
        %619 = vmatprep.subr.mxu0 0.0
        %620 = vmatpush1.msra.mxu0 %v596
        %621 = vmatprep.subr.mxu0 0.0
        %622 = vmatpush1.msra.mxu0 %v598
        %623 = vmatprep.subr.mxu0 0.0
        %624 = vmatpush1.msra.mxu0 %v600
        %625 = vmatprep.subr.mxu0 0.0
        %626 = vmatpush1.msra.mxu0 0.0
        %627 = vmatprep.subr.mxu0 0.0
        %628 = vmatpush1.msra.mxu0 0.0
        %629 = vmatprep.subr.mxu0 0.0
        %630 = vmatpush1.msra.mxu0 0.0
        %631 = vmatprep.subr.mxu0 0.0
        %632 = vmatpush1.msra.mxu0 0.0
        %633 = vmatprep.subr.mxu0 0.0
        %634 = vmatpush1.msra.mxu0 0.0
        %635 = vmatprep.subr.mxu0 0.0
        %636 = vmatpush1.msra.mxu0 0.0
        %637 = vmatprep.subr.mxu0 0.0
        %638 = vmatpush1.msra.mxu0 0.0
        %639 = vmatprep.subr.mxu0 0.0
        %640 = vmatpush1.msra.mxu0 0.0
        %641 = vmatprep.subr.mxu0 0.0
        %642 = vmatpush1.msra.mxu0 0.0
        %643 = vmatprep.subr.mxu0 0.0
        %644 = vmatpush1.msra.mxu0 0.0
        %645 = vmatprep.subr.mxu0 0.0
        %646 = vmatpush1.msra.mxu0 0.0
        %647 = vmatprep.subr.mxu0 0.0
        %648 = vmatpush1.msra.mxu0 0.0
        %649 = vmatprep.subr.mxu0 0.0
        %650 = vmatpush1.msra.mxu0 0.0
        %651 = vmatprep.subr.mxu0 0.0
        %652 = vmatpush1.msra.mxu0 0.0
        %653 = vmatprep.subr.mxu0 0.0
        %654 = vmatpush1.msra.mxu0 0.0
        %655 = vmatprep.subr.mxu0 0.0
        %656 = vmatpush1.msra.mxu0 0.0
        %657 = vmatprep.subr.mxu0 0.0
        %658 = vmatpush1.msra.mxu0 0.0
        %659 = vmatprep.subr.mxu0 0.0
        %660 = vmatpush1.msra.mxu0 0.0
        %661 = vmatprep.subr.mxu0 0.0
        %662 = vmatpush1.msra.mxu0 0.0
        %663 = vmatprep.subr.mxu0 0.0
        %664 = vmatpush1.msra.mxu0 0.0
        %665 = vmatprep.subr.mxu0 0.0
        %666 = vmatpush1.msra.mxu0 0.0
        %667 = vmatprep.subr.mxu0 0.0
        %668 = vmatpush1.msra.mxu0 0.0
        %669 = vmatprep.subr.mxu0 0.0
        %670 = vmatpush1.msra.mxu0 0.0
        %671 = vmatprep.subr.mxu0 0.0
        %672 = vmatpush1.msra.mxu0 0.0
        %673 = vmatprep.subr.mxu0 0.0
        %674 = vmatpush1.msra.mxu0 0.0
        %675 = vmatprep.subr.mxu0 0.0
        %676 = vmatpush1.msra.mxu0 0.0
        %677 = vmatprep.subr.mxu0 0.0
        %678 = vmatpush1.msra.mxu0 0.0
        %679 = vmatprep.subr.mxu0 0.0
        %680 = vmatpush1.msra.mxu0 0.0
        %681 = vmatprep.mubr.f32.mxu0 0.0
        %682 = vmatmul.mubr.f32.gmra.mrb[0].mxu0 %v606
        %v683 = vpop.f32.mrb[0].mxu0
        %v684 = vadd.f32 0.0, %v683
        %v685 = vpop.f32.mrb[0].mxu0
        %686 = vmatprep.mubr.f32.mxu0 0.0
        %687 = vmatmul.mubr.f32.gmra.mrb[0].mxu0 %v609
        %v688 = vpop.f32.mrb[0].mxu0
        %v689 = vadd.f32 0.0, %v688
        %v690 = vpop.f32.mrb[0].mxu0
        %691 = vmatprep.mubr.f32.mxu0 0.0
        %692 = vmatmul.mubr.f32.gmra.mrb[0].mxu0 %v612
        %v693 = vpop.f32.mrb[0].mxu0
        %v694 = vadd.f32 0.0, %v693
        %v695 = vpop.f32.mrb[0].mxu0
        %696 = vmatprep.mubr.f32.mxu0 0.0
        %697 = vmatmul.mubr.f32.gmra.mrb[0].mxu0 %v615
        %v698 = vpop.f32.mrb[0].mxu0
        %v699 = vadd.f32 0.0, %v698
        %v700 = vpop.f32.mrb[0].mxu0
        %701 = vdwg.mxu0
        %v702 = vld [vmem:[#allocation7] sm:$0xff]
        %v703 = vld [vmem:[#allocation7 + $0x8] sm:$0xff]
        %v704 = vld [vmem:[%s4] sm:$0x1]
        %v706 = vlaneseq
        %v707 = vshrl.u32 %v706, 7
        %v708 = vsub.s32 0, %v707
        %v709 = vrot.slane %v704, %v708
        %v712 = vsel %vm439, %v684, 0
        %v715 = vsel %vm439, %v689, 0
        %v718 = vsel %vm439, %v694, 0
        %v721 = vsel %vm439, %v699, 0
        %723 = vmatprep.subr.mxu0 0.0
        %724 = vmatpush1.msra.mxu0 %v702
        %725 = vmatprep.subr.mxu0 0.0
        %726 = vmatpush1.msra.mxu0 %v703
        %727 = vmatprep.subr.mxu0 0.0
        %728 = vmatpush1.msra.mxu0 0.0
        %729 = vmatprep.subr.mxu0 0.0
        %730 = vmatpush1.msra.mxu0 0.0
        %731 = vmatprep.subr.mxu0 0.0
        %732 = vmatpush1.msra.mxu0 0.0
        %733 = vmatprep.subr.mxu0 0.0
        %734 = vmatpush1.msra.mxu0 0.0
        %735 = vmatprep.subr.mxu0 0.0
        %736 = vmatpush1.msra.mxu0 0.0
        %737 = vmatprep.subr.mxu0 0.0
        %738 = vmatpush1.msra.mxu0 0.0
        %739 = vmatprep.subr.mxu0 0.0
        %740 = vmatpush1.msra.mxu0 0.0
        %741 = vmatprep.subr.mxu0 0.0
        %742 = vmatpush1.msra.mxu0 0.0
        %743 = vmatprep.subr.mxu0 0.0
        %744 = vmatpush1.msra.mxu0 0.0
        %745 = vmatprep.subr.mxu0 0.0
        %746 = vmatpush1.msra.mxu0 0.0
        %747 = vmatprep.subr.mxu0 0.0
        %748 = vmatpush1.msra.mxu0 0.0
        %749 = vmatprep.subr.mxu0 0.0
        %750 = vmatpush1.msra.mxu0 0.0
        %751 = vmatprep.subr.mxu0 0.0
        %752 = vmatpush1.msra.mxu0 0.0
        %753 = vmatprep.subr.mxu0 0.0
        %754 = vmatpush1.msra.mxu0 0.0
        %755 = vmatprep.subr.mxu0 0.0
        %756 = vmatpush1.msra.mxu0 0.0
        %757 = vmatprep.subr.mxu0 0.0
        %758 = vmatpush1.msra.mxu0 0.0
        %759 = vmatprep.subr.mxu0 0.0
        %760 = vmatpush1.msra.mxu0 0.0
        %761 = vmatprep.subr.mxu0 0.0
        %762 = vmatpush1.msra.mxu0 0.0
        %763 = vmatprep.subr.mxu0 0.0
        %764 = vmatpush1.msra.mxu0 0.0
        %765 = vmatprep.subr.mxu0 0.0
        %766 = vmatpush1.msra.mxu0 0.0
        %767 = vmatprep.subr.mxu0 0.0
        %768 = vmatpush1.msra.mxu0 0.0
        %769 = vmatprep.subr.mxu0 0.0
        %770 = vmatpush1.msra.mxu0 0.0
        %771 = vmatprep.subr.mxu0 0.0
        %772 = vmatpush1.msra.mxu0 0.0
        %773 = vmatprep.subr.mxu0 0.0
        %774 = vmatpush1.msra.mxu0 0.0
        %775 = vmatprep.subr.mxu0 0.0
        %776 = vmatpush1.msra.mxu0 0.0
        %777 = vmatprep.subr.mxu0 0.0
        %778 = vmatpush1.msra.mxu0 0.0
        %779 = vmatprep.subr.mxu0 0.0
        %780 = vmatpush1.msra.mxu0 0.0
        %781 = vmatprep.subr.mxu0 0.0
        %782 = vmatpush1.msra.mxu0 0.0
        %783 = vmatprep.subr.mxu0 0.0
        %784 = vmatpush1.msra.mxu0 0.0
        %785 = vmatprep.subr.mxu0 0.0
        %786 = vmatpush1.msra.mxu0 0.0
        %787 = vmatprep.mubr.f32.mxu0 0.0
        %788 = vmatmul.mubr.f32.gmra.mrb[0].mxu0 %v712
        %v789 = vpop.f32.mrb[0].mxu0
        %v790 = vadd.f32 %v709, %v789
        %v791 = vpop.f32.mrb[0].mxu0
        %792 = vmatprep.mubr.f32.mxu0 0.0
        %793 = vmatmul.mubr.f32.gmra.mrb[0].mxu0 %v715
        %v794 = vpop.f32.mrb[0].mxu0
        %v795 = vadd.f32 %v709, %v794
        %v796 = vpop.f32.mrb[0].mxu0
        %797 = vmatprep.mubr.f32.mxu0 0.0
        %798 = vmatmul.mubr.f32.gmra.mrb[0].mxu0 %v718
        %v799 = vpop.f32.mrb[0].mxu0
        %v800 = vadd.f32 %v709, %v799
        %v801 = vpop.f32.mrb[0].mxu0
        %802 = vmatprep.mubr.f32.mxu0 0.0
        %803 = vmatmul.mubr.f32.gmra.mrb[0].mxu0 %v721
        %v804 = vpop.f32.mrb[0].mxu0
        %v805 = vadd.f32 %v709, %v804
        %v806 = vpop.f32.mrb[0].mxu0
        %807 = vdwg.mxu0
        %v808 = vadd.f32 %v314, %v790
        %v809 = vadd.f32 %v315, %v795
        %v810 = vadd.f32 %v316, %v800
        %v811 = vadd.f32 %v317, %v805
        %812 = vst.msk [vmem:[%s313] sm:$0xff] %vm329, %v808
        %813 = vst.msk [vmem:[%s313 + $0x8] sm:$0xff] %vm329, %v809
        %814 = vst.msk [vmem:[%s313 + $0x10] sm:$0xff] %vm329, %v810
        %815 = vst.msk [vmem:[%s313 + $0x18] sm:$0xff] %vm329, %v811
        %s816 = sand.u32 %s164, 1
        %s817 = scalar_lea.sflag [#allocation4], %s816
        %s818 = sand.u32 %s164, 1
        %s819 = smul.addr %s818, 32
        %s820 = scalar_lea.vmem [#allocation10], %s819
        // Predicated region
        $region61: #{tpu_custom_call.1} parent=43 // pred_check
          %p821 = pneg %p174
        $region62: #{tpu_custom_call.1} parent=43 // pred_check_branch
          %823 = sbr.rel (%p821) target = $region64
        $region63: #{tpu_custom_call.1} parent=43 // pred_region
          %s825 = ssub.s32 512, 512
          %826 = vsyncadd %s817, %s825
          %s827 = smul.addr %s25, 4
          %s828 = smul.addr %s827, 128
          %s829 = scalar_lea.hbm %s6, %s828
          %s830 = sshll.u32 %s820, 4
          %s831 = int_to_ptr.vmem [resolvable:$true] %s830
          %836 = dma.vmem_to_hbm [thread:$0]  %s831, 512, %s829, %s817, 128, 128, 8
        $region64: #{tpu_custom_call.1} parent=43 // pred_fallthru
          _
      $region44: #{tpu_custom_call.1} parent=5 // pred_fallthru
        _
      %p837 = scmp.le.s32.totalorder 2, %s20
      // Predicated region
      $region65: #{tpu_custom_call.1} parent=5 // pred_check
        %p838 = pneg %p837
      $region66: #{tpu_custom_call.1} parent=5 // pred_check_branch
        %840 = sbr.rel (%p838) target = $region68
      $region67: #{tpu_custom_call.1} parent=5 // pred_region
        %s841 = ssub.s32 %s20, 2
        // Predicated region
        $region69: #{tpu_custom_call.1} parent=67 // pred_check
          %p842 = pneg %p180
        $region70: #{tpu_custom_call.1} parent=67 // pred_check_branch
          %844 = sbr.rel (%p842) target = $region72
        $region71: #{tpu_custom_call.1} parent=67 // pred_region
          %s845 = sand.u32 %s165, 1
          %s846 = scalar_lea.sflag [#allocation4], %s845
          %s847 = sand.u32 %s165, 1
          %s848 = smul.addr %s847, 32
          %s849 = scalar_lea.vmem [#allocation10], %s848
          %850 = dma.done %s846, 512
        $region72: #{tpu_custom_call.1} parent=67 // pred_fallthru
          _
      $region68: #{tpu_custom_call.1} parent=5 // pred_fallthru
        _
    $region6: #{tpu_custom_call.1} parent=1 // loop_footer
      %s24 = sadd.s32 1, %s20
    $region7: #{tpu_custom_call.1} parent=1 // loop_footer_branch
      %19 = sbr.rel target = $region3
    $region8: #{tpu_custom_call.1} parent=1 // loop_exit
      _
    %851 = vsyncpa [#allocation3], 1
    %s852 = scalar_lea.sflag [#allocation3], 1
    %853 = vsyncpa %s852, 1
    %854 = vsyncpa [#allocation6], 1
    %855 = vsyncpa [#allocation9], 1
    %856 = vsyncpa [#allocation4], 1
    %s857 = scalar_lea.sflag [#allocation4], 1
    %858 = vsyncpa %s857, 1

</llo_original>
